<compile_context>
chip_gen: v5e
topology: v5e:2x2
jax: 0.10.0
libtpu: 0.0.40
codegen_flags: <defaults>
</compile_context>

<pallas_src>
import functools

import jax
import jax.numpy as jnp
from jax.experimental import pallas as pl
from jax.experimental.pallas import tpu as pltpu

_NEG_BIG = -1e30  # effectively -inf for padded lanes (exp -> 0)


def _timesteps_kernel(x_ref, o_ref, *, n_steps: int):
    # x_ref / o_ref: (1, n_pad) float32 rows in VMEM; lanes = timesteps.
    x = x_ref[...]
    n_pad = x.shape[-1]
    lane = jax.lax.broadcasted_iota(jnp.int32, (1, n_pad), 1)

    # Fused concat([v, the_one]) + padding mask:
    #   lane <  n_steps-1 : v
    #   lane == n_steps-1 : the_one (1.0)
    #   lane >= n_steps   : -BIG  (contributes nothing to softmax / cumsum)
    x = jnp.where(lane == n_steps - 1, 1.0,
                  jnp.where(lane < n_steps - 1, x, _NEG_BIG))

    # Numerically-stable softmax numerator (normalization deferred).
    m = jnp.max(x, axis=-1, keepdims=True)
    e = jnp.exp(x - m)                               # padded lanes -> 0.0

    # Log-step (Hillis-Steele) inclusive prefix sum along the lane axis:
    # rolls hit the XLU slot, masked adds hit the VPU slot; O(log2 N) vreg ops.
    cum = e
    shift = 1
    while shift < n_steps:
        rolled = pltpu.roll(cum, shift=shift, axis=1)   # axis must be >= 0
        cum = cum + jnp.where(lane >= shift, rolled, 0.0)
        shift *= 2

    # Normalize by the last real lane of the finished scan (== sum of exp over
    # real lanes); no extra cross-lane reduce, and timestep[-1] == 1.0 exactly.
    s = cum[:, n_steps - 1:n_steps]                     # (1, 1)
    o_ref[...] = cum * pl.reciprocal(s, approx=False)


def pack_v(v: jax.Array) -> jax.Array:
    """Init-time packing: (n_steps-1,) parameter -> lane-dense (1, n_pad) row.

    Do this ONCE when the parameter is created/updated, not per forward call.
    Padded lanes are don't-care (the kernel overwrites every lane >= n_steps-1).
    """
    n_steps = v.shape[0] + 1
    n_pad = ((n_steps + 127) // 128) * 128
    return jnp.pad(v.astype(jnp.float32),
                   (0, n_pad - (n_steps - 1))).reshape(1, n_pad)


def timesteps_padded(v_row: jax.Array, n_steps: int) -> jax.Array:
    """Hot path: packed (1, n_pad) parameter row -> padded (1, n_pad) timesteps.

    Lanes >= n_steps of the output are meaningless and must be ignored by the
    consumer (or sliced off, as in learnable_timesteps_default below).
    """
    n_pad = v_row.shape[-1]
    return pl.pallas_call(
        functools.partial(_timesteps_kernel, n_steps=n_steps),
        out_shape=jax.ShapeDtypeStruct((1, n_pad), jnp.float32),
        in_specs=[pl.BlockSpec((1, n_pad), lambda: (0, 0))],
        out_specs=pl.BlockSpec((1, n_pad), lambda: (0, 0)),
    )(v_row)


def learnable_timesteps_default(v: jax.Array) -> jax.Array:
    """Convenience wrapper matching the PyTorch forward: (n_steps-1,) -> (n_steps,)."""
    n_steps = v.shape[0] + 1
    row = pack_v(v)                       # init-time op; kept here only for convenience
    out = timesteps_padded(row, n_steps)
    return out[0, :n_steps]


def _reference(v: jax.Array) -> jax.Array:
    logits = jnp.concatenate([v.astype(jnp.float32), jnp.ones((1,), jnp.float32)], axis=0)
    return jnp.cumsum(jax.nn.softmax(logits, axis=0), axis=0)


if __name__ == "__main__":
    key = jax.random.PRNGKey(0)
    # n_steps = 8 (module-default style), 37 (non-power-of-two), 128 (full vreg)
    for n_steps in (8, 37, 128):
        key, k = jax.random.split(key)
        # PyTorch module init: v = ones(n_steps - 1); also a "trained" random v.
        v_init = jnp.ones((n_steps - 1,), dtype=jnp.float32)
        v_rand = jax.random.normal(k, (n_steps - 1,), dtype=jnp.float32)

        for vec in (v_init, v_rand):
            # "init-time" packing once, then the per-call kernel launch.
            row = pack_v(vec)
            padded = jax.block_until_ready(timesteps_padded(row, n_steps))
            got = padded[0, :n_steps]
            want = jax.block_until_ready(_reference(vec))
            assert got.shape == (n_steps,)
            assert jnp.allclose(got, want, atol=1e-5, rtol=1e-5), (n_steps, got, want)
            # endpoint behavior: cumsum of softmax ends at exactly 1.0
            assert jnp.abs(got[-1] - 1.0) < 1e-6

    print("KERNEL_OK")
</pallas_src>

<mosaic_0001>
module attributes {stable_mosaic.version = 11 : i64} {
  func.func @_timesteps_kernel(%arg0: memref<1x128xf32, #tpu.memory_space<vmem>>, %arg1: memref<1x128xf32, #tpu.memory_space<vmem>>) attributes {dimension_semantics = [], scalar_prefetch = 0 : i64, scratch_operands = 0 : i64, tpu.core_type = #tpu.core_type<tc>} {
    %c0 = arith.constant 0 : index
    %c0_0 = arith.constant 0 : index
    %0 = vector.load %arg0[%c0, %c0_0] : memref<1x128xf32, #tpu.memory_space<vmem>>, vector<1x128xf32>
    %1 = tpu.iota {dimensions = array<i32: 1>} : vector<1x128xi32>
    %c7_i32 = arith.constant 7 : i32
    %2 = vector.broadcast %c7_i32 : i32 to vector<1x128xi32>
    %3 = arith.cmpi eq, %1, %2 : vector<1x128xi32>
    %c7_i32_1 = arith.constant 7 : i32
    %4 = vector.broadcast %c7_i32_1 : i32 to vector<1x128xi32>
    %5 = arith.cmpi slt, %1, %4 : vector<1x128xi32>
    %cst = arith.constant -1.000000e+30 : f32
    %6 = vector.broadcast %cst : f32 to vector<1x128xf32>
    %7 = arith.select %5, %0, %6 : vector<1x128xi1>, vector<1x128xf32>
    %cst_2 = arith.constant 1.000000e+00 : f32
    %8 = vector.broadcast %cst_2 : f32 to vector<1x128xf32>
    %9 = arith.select %3, %8, %7 : vector<1x128xi1>, vector<1x128xf32>
    %cst_3 = arith.constant dense<0xFF800000> : vector<1xf32>
    %10 = vector.multi_reduction <maximumf>, %9, %cst_3 [1] : vector<1x128xf32> to vector<1xf32>
    %11 = vector.shape_cast %10 : vector<1xf32> to vector<1x1xf32>
    %12 = vector.broadcast %11 : vector<1x1xf32> to vector<1x128xf32>
    %13 = arith.subf %9, %12 : vector<1x128xf32>
    %14 = math.exp %13 : vector<1x128xf32>
    %c1_i32 = arith.constant 1 : i32
    %15 = tpu.dynamic_rotate %14 by %c1_i32 dim 1 : vector<1x128xf32>, i32 -> vector<1x128xf32>
    %c1_i32_4 = arith.constant 1 : i32
    %16 = vector.broadcast %c1_i32_4 : i32 to vector<1x128xi32>
    %17 = arith.cmpi sge, %1, %16 : vector<1x128xi32>
    %cst_5 = arith.constant 0.000000e+00 : f32
    %18 = vector.broadcast %cst_5 : f32 to vector<1x128xf32>
    %19 = arith.select %17, %15, %18 : vector<1x128xi1>, vector<1x128xf32>
    %20 = arith.addf %14, %19 : vector<1x128xf32>
    %c2_i32 = arith.constant 2 : i32
    %21 = tpu.dynamic_rotate %20 by %c2_i32 dim 1 : vector<1x128xf32>, i32 -> vector<1x128xf32>
    %c2_i32_6 = arith.constant 2 : i32
    %22 = vector.broadcast %c2_i32_6 : i32 to vector<1x128xi32>
    %23 = arith.cmpi sge, %1, %22 : vector<1x128xi32>
    %cst_7 = arith.constant 0.000000e+00 : f32
    %24 = vector.broadcast %cst_7 : f32 to vector<1x128xf32>
    %25 = arith.select %23, %21, %24 : vector<1x128xi1>, vector<1x128xf32>
    %26 = arith.addf %20, %25 : vector<1x128xf32>
    %c4_i32 = arith.constant 4 : i32
    %27 = tpu.dynamic_rotate %26 by %c4_i32 dim 1 : vector<1x128xf32>, i32 -> vector<1x128xf32>
    %c4_i32_8 = arith.constant 4 : i32
    %28 = vector.broadcast %c4_i32_8 : i32 to vector<1x128xi32>
    %29 = arith.cmpi sge, %1, %28 : vector<1x128xi32>
    %cst_9 = arith.constant 0.000000e+00 : f32
    %30 = vector.broadcast %cst_9 : f32 to vector<1x128xf32>
    %31 = arith.select %29, %27, %30 : vector<1x128xi1>, vector<1x128xf32>
    %32 = arith.addf %26, %31 : vector<1x128xf32>
    %33 = vector.extract_strided_slice %32 {offsets = [0, 7], sizes = [1, 1], strides = [1, 1]} : vector<1x128xf32> to vector<1x1xf32>
    %34 = tpu.reciprocal %33 : vector<1x1xf32> -> vector<1x1xf32>
    %35 = vector.broadcast %34 : vector<1x1xf32> to vector<1x128xf32>
    %36 = arith.mulf %32, %35 : vector<1x128xf32>
    %c0_10 = arith.constant 0 : index
    %c0_11 = arith.constant 0 : index
    %37 = vector.load %arg1[%c0_10, %c0_11] : memref<1x128xf32, #tpu.memory_space<vmem>>, vector<1x128xf32>
    tpu.vector_store %arg1[%c0_10, %c0_11], %36 {strides = array<i32>} : memref<1x128xf32, #tpu.memory_space<vmem>>, vector<1x128xf32>,
    return
  }
}

</mosaic_0001>

<llo_original>
// kernel: tpu_custom_call.1
$region0: #{tpu_custom_call.1}
  #allocation0 [shape = 'u32[]', space=smem, size = 0x4, offset = 0x4, fixed_abs, tag = 'smem constant byte address 0x4 - core index']
  #allocation1 [shape = 'u32[72,128]{1,0:T(1,128)}', space=vmem, size = 0x9000, scoped, tag = 'internal scratch']
  %s0 = inlined_call_operand.hbm [shape: f32[1,128], index: 0, kind: input, shape index: {}]
  %s1 = inlined_call_operand.hbm [shape: f32[1,128], index: 1, kind: output, shape index: {}]
  %s2 = sld [smem:[#allocation0]]
  $region18: #{tpu_custom_call.1} parent=0
    _
  %s4 = ssub.s32 1, %s2
  %s5 = scalar_select 0, %s4, %s2
  $region1: #{tpu_custom_call.1} parent=0
    #allocation2 [shape = 'u8[512]{0}', space=vmem, size = 0x400, scoped, tag = 'input window, operand 0, single buffered']
    #allocation3 [shape = 's32[1]{0}', space=sflag, size = 0x4, scoped, tag = 'scoped memory for tpu_custom_call.1']
    #allocation4 [shape = 's32[1]{0}', space=sflag, size = 0x4, scoped, tag = 'scoped memory for tpu_custom_call.1']
    #allocation5 [shape = 'u8[512]{0}', space=vmem, size = 0x400, scoped, tag = 'output window, operand 0, single buffered']
    %6 = vsyncpa [#allocation3], 0
    %7 = vsyncpa [#allocation4], 0
    // Predicated region
    $region2: #{tpu_custom_call.1} parent=1 // pred_check
      _
    $region3: #{tpu_custom_call.1} parent=1 // pred_check_branch
      %9 = sbr.rel (0) target = $region5
    $region4: #{tpu_custom_call.1} parent=1 // pred_region
      %11 = vsyncadd [#allocation3], 0
      %s13 = sshll.u32 %s0, 4
      %s14 = int_to_ptr.hbm [resolvable:$true] %s13
      %s15 = sshll.u32 [#allocation2], 4
      %s16 = int_to_ptr.vmem [resolvable:$true] %s15
      %18 = dma.hbm_to_vmem [thread:$0]  %s14, 16, %s16, [#allocation3]
    $region5: #{tpu_custom_call.1} parent=1 // pred_fallthru
      _
    // Predicated region
    $region6: #{tpu_custom_call.1} parent=1 // pred_check
      _
    $region7: #{tpu_custom_call.1} parent=1 // pred_check_branch
      %20 = sbr.rel (0) target = $region9
    $region8: #{tpu_custom_call.1} parent=1 // pred_region
      %22 = dma.done [#allocation3], 16
    $region9: #{tpu_custom_call.1} parent=1 // pred_fallthru
      _
    %v23 = vld [vmem:[#allocation2] sm:$0x1]
    %v24 = vlaneseq
    %v25 = vand.u32 %v24, 127
    %vm26 = vcmp.eq.s32.totalorder %v25, 7
    %vm27 = vcmp.lt.s32.totalorder %v25, 7
    %v28 = vsel %vm27, %v23, -1e+30
    %v29 = vsel %vm26, 1.0, %v28
    %vm30 = vcmask 1040384
    %v31 = vsel %vm30, %v29, -inf
    %32 = vmax.xlane.f32.xlu0 %v31
    %v33 = vpop.xlane.xlu0 %32
    %v34 = vsub.f32 %v29, %v33
    %v35 = vmul.f32 %v34, 1.442695
    %v36 = vpow.pop %v35
    %37 = vrot.lane.b32.xlu0 %v36, 1
    %v38 = vpop.permute.xlu0 %37
    %vm39 = vcmp.ge.s32.totalorder %v25, 1
    %v40 = vsel %vm39, %v38, 0.0
    %v41 = vadd.f32 %v36, %v40
    %42 = vrot.lane.b32.xlu0 %v41, 2
    %v43 = vpop.permute.xlu0 %42
    %vm44 = vcmp.ge.s32.totalorder %v25, 2
    %v45 = vsel %vm44, %v43, 0.0
    %v46 = vadd.f32 %v41, %v45
    %47 = vrot.lane.b32.xlu0 %v46, 4
    %v48 = vpop.permute.xlu0 %47
    %vm49 = vcmp.ge.s32.totalorder %v25, 4
    %v50 = vsel %vm49, %v48, 0.0
    %v51 = vadd.f32 %v46, %v50
    %v52 = vrcp.pop %v51
    %v53 = vmul.f32 %v51, %v52
    %v54 = vsub.f32 1.0, %v53
    %v55 = vmul.f32 %v52, %v54
    %v56 = vadd.f32 %v52, %v55
    %vm57 = vweird.f32 %v51
    %vm58 = vweird.f32 %v52
    %vm59 = vmor %vm57, %vm58
    %v60 = vsel %vm59, %v52, %v56
    %v61 = vand.u32 2147483647, %v51
    %vm62 = vcmp.eq.f32.partialorder %v61, 8.507059e+37
    %v63 = vand.u32 %v51, 2147483648
    %v64 = vor.u32 1.1754944e-38, %v63
    %v65 = vsel %vm62, %v64, %v60
    %67 = vset.pattern.permute.xlu0 7
    %68 = vperm.xlu0 %67, %v65
    %v69 = vpop.permute.xlu0 %68
    %v71 = vmul.f32 %v51, %v69
    %72 = vst [vmem:[#allocation5] sm:$0x1] %v71
    // Predicated region
    $region10: #{tpu_custom_call.1} parent=1 // pred_check
      _
    $region11: #{tpu_custom_call.1} parent=1 // pred_check_branch
      %74 = sbr.rel (0) target = $region13
    $region12: #{tpu_custom_call.1} parent=1 // pred_region
      %76 = vsyncadd [#allocation4], 0
      %s78 = sshll.u32 [#allocation5], 4
      %s79 = int_to_ptr.vmem [resolvable:$true] %s78
      %s80 = sshll.u32 %s1, 4
      %s81 = int_to_ptr.hbm [resolvable:$true] %s80
      %83 = dma.vmem_to_hbm [thread:$0]  %s79, 16, %s81, [#allocation4]
    $region13: #{tpu_custom_call.1} parent=1 // pred_fallthru
      _
    // Predicated region
    $region14: #{tpu_custom_call.1} parent=1 // pred_check
      _
    $region15: #{tpu_custom_call.1} parent=1 // pred_check_branch
      %85 = sbr.rel (0) target = $region17
    $region16: #{tpu_custom_call.1} parent=1 // pred_region
      %87 = dma.done [#allocation4], 16
    $region17: #{tpu_custom_call.1} parent=1 // pred_fallthru
      _
    %88 = vsyncpa [#allocation3], 1
    %89 = vsyncpa [#allocation4], 1

</llo_original>
